<compile_context>
chip_gen: v7x
topology: tpu7x:2x2x1
jax: 0.10.0
libtpu: 0.0.40
codegen_flags: <defaults>
</compile_context>

<pallas_src>
import jax
import jax.numpy as jnp
from jax.experimental import pallas as pl
from jax.experimental.pallas import tpu as pltpu


def _concat_attention_kernel(img_ref, qf_ref, qg_ref,
                             wf_ref, wg_ref, wlc_ref, blc_ref,
                             out_ref):
    # img_ref: (TB, L, D_img)     qf_ref/qg_ref: (TB, 1, H)  (f32, precomputed)
    # wf_ref/wg_ref: (D_img, H)   wlc_ref: (1, H)            blc_ref: (1, 1)
    # out_ref: (TB, L, 1)
    tb, L, D_img = img_ref.shape
    H = wf_ref.shape[-1]

    # Flatten batch*location into a single large MXU M dimension.
    img2d = img_ref[...].reshape(tb * L, D_img).astype(wf_ref.dtype)

    fc = jnp.dot(img2d, wf_ref[...],
                 preferred_element_type=jnp.float32).reshape(tb, L, H)
    gc = jnp.dot(img2d, wg_ref[...],
                 preferred_element_type=jnp.float32).reshape(tb, L, H)

    # Add the hoisted question-embedding contributions (broadcast over L).
    fc = fc + qf_ref[...]
    gc = gc + qg_ref[...]

    # GatedTanh (f32 activations on VPU/EUP).
    y = jnp.tanh(fc) * jax.nn.sigmoid(gc)                        # (TB, L, H)

    # Linear(H, 1) as VPU multiply + lane reduce (avoids an N=1 MXU matmul).
    raw = jnp.sum(y * wlc_ref[...].astype(jnp.float32),
                  axis=-1, keepdims=True) + blc_ref[...]         # (TB, L, 1)

    # Softmax over locations (dim=1 in the PyTorch module).
    m = jnp.max(raw, axis=1, keepdims=True)
    e = jnp.exp(raw - m)
    denom = jnp.sum(e, axis=1, keepdims=True)
    out_ref[...] = (e * pl.reciprocal(denom, approx=True)).astype(out_ref.dtype)


def _pick_tb(B, L, target_m=256):
    """Largest divisor of B such that TB*L is around the MXU-saturating M."""
    tb = min(B, max(1, -(-target_m // L)))   # ceil(target_m / L), capped at B
    while B % tb:
        tb -= 1
    return tb


def concatenation_attention(image_feat, question_embedding, params, *,
                            tb=None, matmul_dtype=jnp.float32, expand=True):
    """image_feat: [B, L, D_img], question_embedding: [B, D_txt] -> [B, L, D_img]
    (or [B, L, 1] if expand=False)."""
    B, L, D_img = image_feat.shape
    H = params["wf_img"].shape[1]
    if tb is None:
        tb = _pick_tb(B, L)
    grid = (B // tb,)

    # Hoisted question projections: one efficient batched GEMM each in XLA.
    qf = (question_embedding @ params["wf_txt"] + params["bf"]).astype(jnp.float32)[:, None, :]
    qg = (question_embedding @ params["wg_txt"] + params["bg"]).astype(jnp.float32)[:, None, :]

    # Weights for the big matmuls (optionally bf16 for 2x MXU throughput,
    # half the VMEM/HBM bytes; accumulation stays f32 in-kernel).
    wf_img = params["wf_img"].astype(matmul_dtype)
    wg_img = params["wg_img"].astype(matmul_dtype)
    wlc_row = params["wlc"].reshape(1, H).astype(jnp.float32)
    blc = params["blc"].astype(jnp.float32)

    itemsize = jnp.dtype(matmul_dtype).itemsize
    weight_bytes = 2 * D_img * H * itemsize + (H + 1) * 4
    block_bytes = (tb * L * D_img * image_feat.dtype.itemsize
                   + 2 * tb * H * 4 + tb * L * 4)
    vmem_limit = int(min(64 * 1024 * 1024,
                         max(32 * 1024 * 1024, 6 * (weight_bytes + block_bytes))))

    cost = pl.CostEstimate(
        flops=4 * B * L * D_img * H + 2 * B * L * H,
        transcendentals=2 * B * L * H + B * L,
        bytes_accessed=(B * L * D_img * image_feat.dtype.itemsize
                        + weight_bytes + 2 * B * H * 4 + B * L * 4),
    )

    const2d = lambda shape: pl.BlockSpec(shape, lambda b: (0, 0))

    attn = pl.pallas_call(
        _concat_attention_kernel,
        out_shape=jax.ShapeDtypeStruct((B, L, 1), image_feat.dtype),
        grid_spec=pltpu.PrefetchScalarGridSpec(
            num_scalar_prefetch=0,
            grid=grid,
            in_specs=[
                pl.BlockSpec((tb, L, D_img), lambda b: (b, 0, 0)),  # image_feat
                pl.BlockSpec((tb, 1, H), lambda b: (b, 0, 0)),      # q @ Wf_txt + bf
                pl.BlockSpec((tb, 1, H), lambda b: (b, 0, 0)),      # q @ Wg_txt + bg
                const2d((D_img, H)),                                # Wf (image part)
                const2d((D_img, H)),                                # Wg (image part)
                const2d((1, H)),                                    # Wlc (as a row)
                const2d((1, 1)),                                    # blc
            ],
            out_specs=pl.BlockSpec((tb, L, 1), lambda b: (b, 0, 0)),
        ),
        compiler_params=pltpu.CompilerParams(
            dimension_semantics=("parallel",),
            vmem_limit_bytes=vmem_limit,
        ),
        cost_estimate=cost,
    )(image_feat, qf, qg, wf_img, wg_img, wlc_row, blc)

    if expand:
        # expand_as(image_feat): left to XLA so downstream consumers can fuse it.
        return jnp.broadcast_to(attn, image_feat.shape)
    return attn


def init_params(key, image_feat_dim, txt_dim, hidden_size, dtype=jnp.float32):
    """Synthetic parameters matching the module's __init__ shapes.

    GatedTanh(image_feat_dim + txt_dim, hidden_size) -> two Linears (fc, gate_fc);
    lc = Linear(hidden_size, 1). Stored as [in_dim, out_dim]; the concat-dim
    weights are pre-split into image / text halves so the kernel never
    materializes the concatenation.
    """
    ks = jax.random.split(key, 6)
    d_in = image_feat_dim + txt_dim
    scale_fa = 1.0 / jnp.sqrt(d_in)
    scale_lc = 1.0 / jnp.sqrt(hidden_size)

    wf = jax.random.uniform(ks[0], (d_in, hidden_size), dtype, -scale_fa, scale_fa)
    wg = jax.random.uniform(ks[1], (d_in, hidden_size), dtype, -scale_fa, scale_fa)
    bf = jax.random.uniform(ks[2], (1, hidden_size), dtype, -scale_fa, scale_fa)
    bg = jax.random.uniform(ks[3], (1, hidden_size), dtype, -scale_fa, scale_fa)
    wlc = jax.random.uniform(ks[4], (hidden_size, 1), dtype, -scale_lc, scale_lc)
    blc = jax.random.uniform(ks[5], (1, 1), dtype, -scale_lc, scale_lc)

    return {
        "wf_img": wf[:image_feat_dim], "wf_txt": wf[image_feat_dim:], "bf": bf,
        "wg_img": wg[:image_feat_dim], "wg_txt": wg[image_feat_dim:], "bg": bg,
        "wlc": wlc, "blc": blc,
    }


def _reference(image_feat, question_embedding, p):
    """Pure-JAX reference mirroring the PyTorch forward."""
    B, L, _ = image_feat.shape
    q_exp = jnp.broadcast_to(question_embedding[:, None, :],
                             (B, L, question_embedding.shape[-1]))
    concat = jnp.concatenate([image_feat, q_exp], axis=2)
    wf = jnp.concatenate([p["wf_img"], p["wf_txt"]], axis=0)
    wg = jnp.concatenate([p["wg_img"], p["wg_txt"]], axis=0)
    y = jnp.tanh(concat @ wf + p["bf"]) * jax.nn.sigmoid(concat @ wg + p["bg"])
    raw = y @ p["wlc"] + p["blc"]                       # (B, L, 1)
    attn = jax.nn.softmax(raw, axis=1)
    return jnp.broadcast_to(attn, image_feat.shape)


if __name__ == "__main__":
    # Small, module-consistent shapes: batch=2, num_location=16,
    # image_feat_dim=32, txt_rnn_embeding_dim=32, hidden_size=32.
    B, L, D_IMG, D_TXT, H = 2, 16, 32, 32, 32

    key = jax.random.PRNGKey(0)
    k_img, k_q, k_p = jax.random.split(key, 3)
    image_feat = jax.random.normal(k_img, (B, L, D_IMG), jnp.float32)
    question_embedding = jax.random.normal(k_q, (B, D_TXT), jnp.float32)
    params = init_params(k_p, D_IMG, D_TXT, H)

    ref = _reference(image_feat, question_embedding, params)

    # f32 matmuls: tight check (approx reciprocal in the softmax -> ~1e-3 tol).
    out_f32 = concatenation_attention(image_feat, question_embedding, params,
                                      matmul_dtype=jnp.float32)
    out_f32 = jax.block_until_ready(out_f32)
    assert out_f32.shape == (B, L, D_IMG)
    assert jnp.allclose(out_f32, ref, atol=1e-3, rtol=1e-3), "f32 mismatch vs reference"

    # bf16 matmul inputs (f32 accumulation / softmax): relaxed tolerance.
    out_bf16 = concatenation_attention(image_feat, question_embedding, params,
                                       matmul_dtype=jnp.bfloat16)
    out_bf16 = jax.block_until_ready(out_bf16)
    assert out_bf16.shape == (B, L, D_IMG)
    assert jnp.allclose(out_bf16, ref, atol=2e-2, rtol=2e-2), "bf16 mismatch vs reference"

    print("KERNEL_OK")
</pallas_src>

<mosaic_0001>
module attributes {stable_mosaic.version = 11 : i64} {
  func.func @_concat_attention_kernel(%arg0: i32, %arg1: memref<2x16x32xf32, #tpu.memory_space<vmem>>, %arg2: memref<2x1x32xf32, #tpu.memory_space<vmem>>, %arg3: memref<2x1x32xf32, #tpu.memory_space<vmem>>, %arg4: memref<32x32xf32, #tpu.memory_space<vmem>>, %arg5: memref<32x32xf32, #tpu.memory_space<vmem>>, %arg6: memref<1x32xf32, #tpu.memory_space<vmem>>, %arg7: memref<1x1xf32, #tpu.memory_space<vmem>>, %arg8: memref<2x16x1xf32, #tpu.memory_space<vmem>>) attributes {dimension_semantics = [#tpu.dimension_semantics<parallel>], iteration_bounds = array<i64: 1>, scalar_prefetch = 0 : i64, scratch_operands = 0 : i64, tpu.core_type = #tpu.core_type<tc>, window_params = [{transform_indices = @transform_0, window_bounds = array<i64: 2, 16, 32>}, {transform_indices = @transform_1, window_bounds = array<i64: 2, 1, 32>}, {transform_indices = @transform_2, window_bounds = array<i64: 2, 1, 32>}, {pipeline_mode = #tpu.pipeline_mode<synchronous>, transform_indices = @transform_3, window_bounds = array<i64: 32, 32>}, {pipeline_mode = #tpu.pipeline_mode<synchronous>, transform_indices = @transform_4, window_bounds = array<i64: 32, 32>}, {pipeline_mode = #tpu.pipeline_mode<synchronous>, transform_indices = @transform_5, window_bounds = array<i64: 1, 32>}, {pipeline_mode = #tpu.pipeline_mode<synchronous>, transform_indices = @transform_6, window_bounds = array<i64: 1, 1>}, {transform_indices = @transform_7, window_bounds = array<i64: 2, 16, 1>}]} {
    %c0 = arith.constant 0 : index
    %c0_0 = arith.constant 0 : index
    %c0_1 = arith.constant 0 : index
    %0 = vector.load %arg1[%c0, %c0_0, %c0_1] : memref<2x16x32xf32, #tpu.memory_space<vmem>>, vector<2x16x32xf32>
    %1 = vector.shape_cast %0 : vector<2x16x32xf32> to vector<32x32xf32>
    %c0_2 = arith.constant 0 : index
    %c0_3 = arith.constant 0 : index
    %2 = vector.load %arg4[%c0_2, %c0_3] : memref<32x32xf32, #tpu.memory_space<vmem>>, vector<32x32xf32>
    %cst = arith.constant dense<0.000000e+00> : vector<32x32xf32>
    %3 = tpu.matmul %1, %2, %cst {dimension_numbers = #tpu.dot_dimension_numbers<[1], [0], [0], [1], [0, 0, 1, 1], [], []>} : vector<32x32xf32>, vector<32x32xf32>, vector<32x32xf32> -> vector<32x32xf32>
    %4 = vector.shape_cast %3 : vector<32x32xf32> to vector<2x16x32xf32>
    %c0_4 = arith.constant 0 : index
    %c0_5 = arith.constant 0 : index
    %5 = vector.load %arg5[%c0_4, %c0_5] : memref<32x32xf32, #tpu.memory_space<vmem>>, vector<32x32xf32>
    %cst_6 = arith.constant dense<0.000000e+00> : vector<32x32xf32>
    %6 = tpu.matmul %1, %5, %cst_6 {dimension_numbers = #tpu.dot_dimension_numbers<[1], [0], [0], [1], [0, 0, 1, 1], [], []>} : vector<32x32xf32>, vector<32x32xf32>, vector<32x32xf32> -> vector<32x32xf32>
    %7 = vector.shape_cast %6 : vector<32x32xf32> to vector<2x16x32xf32>
    %c0_7 = arith.constant 0 : index
    %c0_8 = arith.constant 0 : index
    %c0_9 = arith.constant 0 : index
    %8 = vector.load %arg2[%c0_7, %c0_8, %c0_9] : memref<2x1x32xf32, #tpu.memory_space<vmem>>, vector<2x1x32xf32>
    %9 = vector.broadcast %8 : vector<2x1x32xf32> to vector<2x16x32xf32>
    %10 = arith.addf %4, %9 : vector<2x16x32xf32>
    %c0_10 = arith.constant 0 : index
    %c0_11 = arith.constant 0 : index
    %c0_12 = arith.constant 0 : index
    %11 = vector.load %arg3[%c0_10, %c0_11, %c0_12] : memref<2x1x32xf32, #tpu.memory_space<vmem>>, vector<2x1x32xf32>
    %12 = vector.broadcast %11 : vector<2x1x32xf32> to vector<2x16x32xf32>
    %13 = arith.addf %7, %12 : vector<2x16x32xf32>
    %14 = math.tanh %10 : vector<2x16x32xf32>
    %15 = arith.negf %13 : vector<2x16x32xf32>
    %16 = math.exp %15 : vector<2x16x32xf32>
    %cst_13 = arith.constant 1.000000e+00 : f32
    %17 = vector.broadcast %cst_13 : f32 to vector<2x16x32xf32>
    %18 = arith.addf %17, %16 : vector<2x16x32xf32>
    %19 = arith.divf %17, %18 : vector<2x16x32xf32>
    %20 = arith.mulf %14, %19 : vector<2x16x32xf32>
    %c0_14 = arith.constant 0 : index
    %c0_15 = arith.constant 0 : index
    %21 = vector.load %arg6[%c0_14, %c0_15] : memref<1x32xf32, #tpu.memory_space<vmem>>, vector<1x32xf32>
    %22 = vector.shape_cast %21 : vector<1x32xf32> to vector<1x1x32xf32>
    %23 = vector.broadcast %22 : vector<1x1x32xf32> to vector<2x16x32xf32>
    %24 = arith.mulf %20, %23 : vector<2x16x32xf32>
    %cst_16 = arith.constant dense<0.000000e+00> : vector<2x16xf32>
    %25 = vector.multi_reduction <add>, %24, %cst_16 [2] : vector<2x16x32xf32> to vector<2x16xf32>
    %26 = vector.shape_cast %25 : vector<2x16xf32> to vector<2x16x1xf32>
    %c0_17 = arith.constant 0 : index
    %c0_18 = arith.constant 0 : index
    %27 = vector.load %arg7[%c0_17, %c0_18] : memref<1x1xf32, #tpu.memory_space<vmem>>, vector<1x1xf32>
    %28 = vector.shape_cast %27 : vector<1x1xf32> to vector<1x1x1xf32>
    %29 = vector.broadcast %28 : vector<1x1x1xf32> to vector<2x16x1xf32>
    %30 = arith.addf %26, %29 : vector<2x16x1xf32>
    %cst_19 = arith.constant dense<0xFF800000> : vector<2x1xf32>
    %31 = vector.multi_reduction <maximumf>, %30, %cst_19 [1] : vector<2x16x1xf32> to vector<2x1xf32>
    %32 = vector.shape_cast %31 : vector<2x1xf32> to vector<2x1x1xf32>
    %33 = vector.broadcast %32 : vector<2x1x1xf32> to vector<2x16x1xf32>
    %34 = arith.subf %30, %33 : vector<2x16x1xf32>
    %35 = math.exp %34 : vector<2x16x1xf32>
    %cst_20 = arith.constant dense<0.000000e+00> : vector<2x1xf32>
    %36 = vector.multi_reduction <add>, %35, %cst_20 [1] : vector<2x16x1xf32> to vector<2x1xf32>
    %37 = vector.shape_cast %36 : vector<2x1xf32> to vector<2x1x1xf32>
    %38 = tpu.reciprocal %37 {approx = true} : vector<2x1x1xf32> -> vector<2x1x1xf32>
    %39 = vector.broadcast %38 : vector<2x1x1xf32> to vector<2x16x1xf32>
    %40 = arith.mulf %35, %39 : vector<2x16x1xf32>
    %c0_21 = arith.constant 0 : index
    %c0_22 = arith.constant 0 : index
    %c0_23 = arith.constant 0 : index
    %41 = vector.load %arg8[%c0_21, %c0_22, %c0_23] : memref<2x16x1xf32, #tpu.memory_space<vmem>>, vector<2x16x1xf32>
    tpu.vector_store %arg8[%c0_21, %c0_22, %c0_23], %40 {strides = array<i32>} : memref<2x16x1xf32, #tpu.memory_space<vmem>>, vector<2x16x1xf32>,
    return
  }
  func.func @transform_0(%arg0: i32) -> (i32, i32, i32) {
    %c0_i32 = arith.constant 0 : i32
    %c0_i32_0 = arith.constant 0 : i32
    %c0_i32_1 = arith.constant 0 : i32
    return %arg0, %c0_i32, %c0_i32_0 : i32, i32, i32
  }
  func.func @transform_1(%arg0: i32) -> (i32, i32, i32) {
    %c0_i32 = arith.constant 0 : i32
    %c0_i32_0 = arith.constant 0 : i32
    %c0_i32_1 = arith.constant 0 : i32
    return %arg0, %c0_i32, %c0_i32_0 : i32, i32, i32
  }
  func.func @transform_2(%arg0: i32) -> (i32, i32, i32) {
    %c0_i32 = arith.constant 0 : i32
    %c0_i32_0 = arith.constant 0 : i32
    %c0_i32_1 = arith.constant 0 : i32
    return %arg0, %c0_i32, %c0_i32_0 : i32, i32, i32
  }
  func.func @transform_3(%arg0: i32) -> (i32, i32) {
    %c0_i32 = arith.constant 0 : i32
    %c0_i32_0 = arith.constant 0 : i32
    %c0_i32_1 = arith.constant 0 : i32
    return %c0_i32, %c0_i32_0 : i32, i32
  }
  func.func @transform_4(%arg0: i32) -> (i32, i32) {
    %c0_i32 = arith.constant 0 : i32
    %c0_i32_0 = arith.constant 0 : i32
    %c0_i32_1 = arith.constant 0 : i32
    return %c0_i32, %c0_i32_0 : i32, i32
  }
  func.func @transform_5(%arg0: i32) -> (i32, i32) {
    %c0_i32 = arith.constant 0 : i32
    %c0_i32_0 = arith.constant 0 : i32
    %c0_i32_1 = arith.constant 0 : i32
    return %c0_i32, %c0_i32_0 : i32, i32
  }
  func.func @transform_6(%arg0: i32) -> (i32, i32) {
    %c0_i32 = arith.constant 0 : i32
    %c0_i32_0 = arith.constant 0 : i32
    %c0_i32_1 = arith.constant 0 : i32
    return %c0_i32, %c0_i32_0 : i32, i32
  }
  func.func @transform_7(%arg0: i32) -> (i32, i32, i32) {
    %c0_i32 = arith.constant 0 : i32
    %c0_i32_0 = arith.constant 0 : i32
    %c0_i32_1 = arith.constant 0 : i32
    return %arg0, %c0_i32, %c0_i32_0 : i32, i32, i32
  }
}

</mosaic_0001>

<llo_original>
// kernel: tpu_custom_call.1
$region0: #{tpu_custom_call.1}
  #allocation0 [shape = 'u32[]', space=smem, size = 0x4, offset = 0x4, fixed_abs, tag = 'smem constant byte address 0x4 - core index']
  #allocation1 [shape = 'u32[144,128]{1,0:T(1,128)}', space=vmem, size = 0x12000, scoped, tag = 'internal scratch']
  #allocation2 [shape = 'f32[1,1]{1,0:T(1,128)S(1)}', space=vmem, size = 0x200, scoped, tag = 'scoped memory for tpu_custom_call.1']
  %s0 = inlined_call_operand.hbm [shape: f32[2,16,32], index: 0, kind: input, shape index: {}]
  %s1 = inlined_call_operand.vmem [shape: f32[2,1,32], index: 1, kind: input, shape index: {}]
  %s2 = inlined_call_operand.vmem [shape: f32[2,1,32], index: 2, kind: input, shape index: {}]
  %s3 = inlined_call_operand.hbm [shape: f32[32,32], index: 3, kind: input, shape index: {}]
  %s4 = inlined_call_operand.hbm [shape: f32[32,32], index: 4, kind: input, shape index: {}]
  %s5 = inlined_call_operand.vmem [shape: f32[1,32], index: 5, kind: input, shape index: {}]
  %s6 = inlined_call_operand.<no memory space> [shape: f32[1,1], index: 6, kind: input, shape index: {}]
  %s7 = inlined_call_operand.vmem [shape: f32[2,16,1], index: 7, kind: output, shape index: {}]
  %s8 = sld [smem:[#allocation0]]
  $region50: #{tpu_custom_call.1} parent=0
    _
  %s10 = ssub.s32 1, %s8
  %s11 = scalar_select 0, %s10, %s8
  %v12 = vstv %s6
  %13 = vst [vmem:[#allocation2] sm:$0x1] %v12
  $region1: #{tpu_custom_call.1} parent=0
    #allocation3 [shape = 'u8[16384]{0}', space=vmem, size = 0x4000, scoped, tag = 'input window, operand 0, single buffered']
    #allocation4 [shape = 's32[1]{0}', space=sflag, size = 0x4, scoped, tag = 'scoped memory for tpu_custom_call.1']
    #allocation5 [shape = 'u8[16384]{0}', space=vmem, size = 0x4000, scoped, tag = 'input window, operand 3, single buffered']
    #allocation6 [shape = 's32[1]{0}', space=sflag, size = 0x4, scoped, tag = 'scoped memory for tpu_custom_call.1']
    #allocation7 [shape = 'u8[16384]{0}', space=vmem, size = 0x4000, scoped, tag = 'input window, operand 4, single buffered']
    %14 = vsyncpa [#allocation4], 0
    %15 = vsyncpa [#allocation6], 0
    // Predicated region
    $region2: #{tpu_custom_call.1} parent=1 // pred_check
      _
    $region3: #{tpu_custom_call.1} parent=1 // pred_check_branch
      %17 = sbr.rel (0) target = $region5
    $region4: #{tpu_custom_call.1} parent=1 // pred_region
      %s19 = ssub.s32 512, 512
      %20 = vsyncadd [#allocation4], %s19
      %s21 = sshll.u32 [#allocation3], 4
      %s22 = int_to_ptr.vmem [resolvable:$true] %s21
      %27 = dma.hbm_to_vmem [thread:$0]  %s0, 512, %s22, [#allocation4], 128, 128, 8
    $region5: #{tpu_custom_call.1} parent=1 // pred_fallthru
      _
    // Predicated region
    $region6: #{tpu_custom_call.1} parent=1 // pred_check
      _
    $region7: #{tpu_custom_call.1} parent=1 // pred_check_branch
      %29 = sbr.rel (0) target = $region9
    $region8: #{tpu_custom_call.1} parent=1 // pred_region
      _
    $region9: #{tpu_custom_call.1} parent=1 // pred_fallthru
      _
    // Predicated region
    $region10: #{tpu_custom_call.1} parent=1 // pred_check
      _
    $region11: #{tpu_custom_call.1} parent=1 // pred_check_branch
      %31 = sbr.rel (0) target = $region13
    $region12: #{tpu_custom_call.1} parent=1 // pred_region
      _
    $region13: #{tpu_custom_call.1} parent=1 // pred_fallthru
      _
    // Predicated region
    $region14: #{tpu_custom_call.1} parent=1 // pred_check
      _
    $region15: #{tpu_custom_call.1} parent=1 // pred_check_branch
      %33 = sbr.rel (0) target = $region17
    $region16: #{tpu_custom_call.1} parent=1 // pred_region
      %s35 = ssub.s32 512, 512
      %36 = vsyncadd [#allocation6], %s35
      %s37 = sshll.u32 [#allocation5], 4
      %s38 = int_to_ptr.vmem [resolvable:$true] %s37
      %43 = dma.hbm_to_vmem [thread:$0]  %s3, 512, %s38, [#allocation6], 128, 128, 8
    $region17: #{tpu_custom_call.1} parent=1 // pred_fallthru
      _
    // Predicated region
    $region18: #{tpu_custom_call.1} parent=1 // pred_check
      _
    $region19: #{tpu_custom_call.1} parent=1 // pred_check_branch
      %45 = sbr.rel (0) target = $region21
    $region20: #{tpu_custom_call.1} parent=1 // pred_region
      %s47 = ssub.s32 512, 512
      %48 = vsyncadd [#allocation6], %s47
      %s49 = sshll.u32 [#allocation7], 4
      %s50 = int_to_ptr.vmem [resolvable:$true] %s49
      %55 = dma.hbm_to_vmem [thread:$0]  %s4, 512, %s50, [#allocation6], 128, 128, 8
    $region21: #{tpu_custom_call.1} parent=1 // pred_fallthru
      _
    // Predicated region
    $region22: #{tpu_custom_call.1} parent=1 // pred_check
      _
    $region23: #{tpu_custom_call.1} parent=1 // pred_check_branch
      %57 = sbr.rel (0) target = $region25
    $region24: #{tpu_custom_call.1} parent=1 // pred_region
      _
    $region25: #{tpu_custom_call.1} parent=1 // pred_fallthru
      _
    // Predicated region
    $region26: #{tpu_custom_call.1} parent=1 // pred_check
      _
    $region27: #{tpu_custom_call.1} parent=1 // pred_check_branch
      %59 = sbr.rel (0) target = $region29
    $region28: #{tpu_custom_call.1} parent=1 // pred_region
      _
    $region29: #{tpu_custom_call.1} parent=1 // pred_fallthru
      _
    // Predicated region
    $region30: #{tpu_custom_call.1} parent=1 // pred_check
      _
    $region31: #{tpu_custom_call.1} parent=1 // pred_check_branch
      %61 = sbr.rel (0) target = $region33
    $region32: #{tpu_custom_call.1} parent=1 // pred_region
      %62 = dma.done [#allocation4], 512
    $region33: #{tpu_custom_call.1} parent=1 // pred_fallthru
      _
    // Predicated region
    $region34: #{tpu_custom_call.1} parent=1 // pred_check
      _
    $region35: #{tpu_custom_call.1} parent=1 // pred_check_branch
      %64 = sbr.rel (0) target = $region37
    $region36: #{tpu_custom_call.1} parent=1 // pred_region
      %65 = dma.done [#allocation6], 512
    $region37: #{tpu_custom_call.1} parent=1 // pred_fallthru
      _
    // Predicated region
    $region38: #{tpu_custom_call.1} parent=1 // pred_check
      _
    $region39: #{tpu_custom_call.1} parent=1 // pred_check_branch
      %67 = sbr.rel (0) target = $region41
    $region40: #{tpu_custom_call.1} parent=1 // pred_region
      %68 = dma.done [#allocation6], 512
    $region41: #{tpu_custom_call.1} parent=1 // pred_fallthru
      _
    %v69 = vld [vmem:[#allocation3] sm:$0xff]
    %v70 = vld [vmem:[#allocation3 + $0x8] sm:$0xff]
    %v71 = vld [vmem:[#allocation3 + $0x10] sm:$0xff]
    %v72 = vld [vmem:[#allocation3 + $0x18] sm:$0xff]
    %v73 = vld [vmem:[#allocation5] sm:$0xff]
    %v74 = vld [vmem:[#allocation5 + $0x8] sm:$0xff]
    %v75 = vld [vmem:[#allocation5 + $0x10] sm:$0xff]
    %v76 = vld [vmem:[#allocation5 + $0x18] sm:$0xff]
    %vm77 = vcmask 261120
    %v79 = vsel %vm77, %v69, 0
    %v82 = vsel %vm77, %v70, 0
    %v85 = vsel %vm77, %v71, 0
    %v88 = vsel %vm77, %v72, 0
    %90 = vmatprep.subr.mxu0 0.0
    %91 = vmatpush1.msra.mxu0 %v73
    %92 = vmatprep.subr.mxu0 0.0
    %93 = vmatpush1.msra.mxu0 %v74
    %94 = vmatprep.subr.mxu0 0.0
    %95 = vmatpush1.msra.mxu0 %v75
    %96 = vmatprep.subr.mxu0 0.0
    %97 = vmatpush1.msra.mxu0 %v76
    %98 = vmatprep.subr.mxu0 0.0
    %99 = vmatpush1.msra.mxu0 0.0
    %100 = vmatprep.subr.mxu0 0.0
    %101 = vmatpush1.msra.mxu0 0.0
    %102 = vmatprep.subr.mxu0 0.0
    %103 = vmatpush1.msra.mxu0 0.0
    %104 = vmatprep.subr.mxu0 0.0
    %105 = vmatpush1.msra.mxu0 0.0
    %106 = vmatprep.subr.mxu0 0.0
    %107 = vmatpush1.msra.mxu0 0.0
    %108 = vmatprep.subr.mxu0 0.0
    %109 = vmatpush1.msra.mxu0 0.0
    %110 = vmatprep.subr.mxu0 0.0
    %111 = vmatpush1.msra.mxu0 0.0
    %112 = vmatprep.subr.mxu0 0.0
    %113 = vmatpush1.msra.mxu0 0.0
    %114 = vmatprep.subr.mxu0 0.0
    %115 = vmatpush1.msra.mxu0 0.0
    %116 = vmatprep.subr.mxu0 0.0
    %117 = vmatpush1.msra.mxu0 0.0
    %118 = vmatprep.subr.mxu0 0.0
    %119 = vmatpush1.msra.mxu0 0.0
    %120 = vmatprep.subr.mxu0 0.0
    %121 = vmatpush1.msra.mxu0 0.0
    %122 = vmatprep.subr.mxu0 0.0
    %123 = vmatpush1.msra.mxu0 0.0
    %124 = vmatprep.subr.mxu0 0.0
    %125 = vmatpush1.msra.mxu0 0.0
    %126 = vmatprep.subr.mxu0 0.0
    %127 = vmatpush1.msra.mxu0 0.0
    %128 = vmatprep.subr.mxu0 0.0
    %129 = vmatpush1.msra.mxu0 0.0
    %130 = vmatprep.subr.mxu0 0.0
    %131 = vmatpush1.msra.mxu0 0.0
    %132 = vmatprep.subr.mxu0 0.0
    %133 = vmatpush1.msra.mxu0 0.0
    %134 = vmatprep.subr.mxu0 0.0
    %135 = vmatpush1.msra.mxu0 0.0
    %136 = vmatprep.subr.mxu0 0.0
    %137 = vmatpush1.msra.mxu0 0.0
    %138 = vmatprep.subr.mxu0 0.0
    %139 = vmatpush1.msra.mxu0 0.0
    %140 = vmatprep.subr.mxu0 0.0
    %141 = vmatpush1.msra.mxu0 0.0
    %142 = vmatprep.subr.mxu0 0.0
    %143 = vmatpush1.msra.mxu0 0.0
    %144 = vmatprep.subr.mxu0 0.0
    %145 = vmatpush1.msra.mxu0 0.0
    %146 = vmatprep.subr.mxu0 0.0
    %147 = vmatpush1.msra.mxu0 0.0
    %148 = vmatprep.subr.mxu0 0.0
    %149 = vmatpush1.msra.mxu0 0.0
    %150 = vmatprep.subr.mxu0 0.0
    %151 = vmatpush1.msra.mxu0 0.0
    %152 = vmatprep.subr.mxu0 0.0
    %153 = vmatpush1.msra.mxu0 0.0
    %154 = vmatprep.mubr.f32.mxu0 0.0
    %155 = vmatmul.mubr.f32.gmra.mrb[0].mxu0 %v79
    %v156 = vpop.f32.mrb[0].mxu0
    %v157 = vadd.f32 0.0, %v156
    %v158 = vpop.f32.mrb[0].mxu0
    %159 = vmatprep.mubr.f32.mxu0 0.0
    %160 = vmatmul.mubr.f32.gmra.mrb[0].mxu0 %v82
    %v161 = vpop.f32.mrb[0].mxu0
    %v162 = vadd.f32 0.0, %v161
    %v163 = vpop.f32.mrb[0].mxu0
    %164 = vmatprep.mubr.f32.mxu0 0.0
    %165 = vmatmul.mubr.f32.gmra.mrb[0].mxu0 %v85
    %v166 = vpop.f32.mrb[0].mxu0
    %v167 = vadd.f32 0.0, %v166
    %v168 = vpop.f32.mrb[0].mxu0
    %169 = vmatprep.mubr.f32.mxu0 0.0
    %170 = vmatmul.mubr.f32.gmra.mrb[0].mxu0 %v88
    %v171 = vpop.f32.mrb[0].mxu0
    %v172 = vadd.f32 0.0, %v171
    %v173 = vpop.f32.mrb[0].mxu0
    %174 = vdwg.mxu0
    %v175 = vld [vmem:[#allocation7] sm:$0xff]
    %v176 = vld [vmem:[#allocation7 + $0x8] sm:$0xff]
    %v177 = vld [vmem:[#allocation7 + $0x10] sm:$0xff]
    %v178 = vld [vmem:[#allocation7 + $0x18] sm:$0xff]
    %179 = vmatprep.subr.mxu0 0.0
    %180 = vmatpush1.msra.mxu0 %v175
    %181 = vmatprep.subr.mxu0 0.0
    %182 = vmatpush1.msra.mxu0 %v176
    %183 = vmatprep.subr.mxu0 0.0
    %184 = vmatpush1.msra.mxu0 %v177
    %185 = vmatprep.subr.mxu0 0.0
    %186 = vmatpush1.msra.mxu0 %v178
    %187 = vmatprep.subr.mxu0 0.0
    %188 = vmatpush1.msra.mxu0 0.0
    %189 = vmatprep.subr.mxu0 0.0
    %190 = vmatpush1.msra.mxu0 0.0
    %191 = vmatprep.subr.mxu0 0.0
    %192 = vmatpush1.msra.mxu0 0.0
    %193 = vmatprep.subr.mxu0 0.0
    %194 = vmatpush1.msra.mxu0 0.0
    %195 = vmatprep.subr.mxu0 0.0
    %196 = vmatpush1.msra.mxu0 0.0
    %197 = vmatprep.subr.mxu0 0.0
    %198 = vmatpush1.msra.mxu0 0.0
    %199 = vmatprep.subr.mxu0 0.0
    %200 = vmatpush1.msra.mxu0 0.0
    %201 = vmatprep.subr.mxu0 0.0
    %202 = vmatpush1.msra.mxu0 0.0
    %203 = vmatprep.subr.mxu0 0.0
    %204 = vmatpush1.msra.mxu0 0.0
    %205 = vmatprep.subr.mxu0 0.0
    %206 = vmatpush1.msra.mxu0 0.0
    %207 = vmatprep.subr.mxu0 0.0
    %208 = vmatpush1.msra.mxu0 0.0
    %209 = vmatprep.subr.mxu0 0.0
    %210 = vmatpush1.msra.mxu0 0.0
    %211 = vmatprep.subr.mxu0 0.0
    %212 = vmatpush1.msra.mxu0 0.0
    %213 = vmatprep.subr.mxu0 0.0
    %214 = vmatpush1.msra.mxu0 0.0
    %215 = vmatprep.subr.mxu0 0.0
    %216 = vmatpush1.msra.mxu0 0.0
    %217 = vmatprep.subr.mxu0 0.0
    %218 = vmatpush1.msra.mxu0 0.0
    %219 = vmatprep.subr.mxu0 0.0
    %220 = vmatpush1.msra.mxu0 0.0
    %221 = vmatprep.subr.mxu0 0.0
    %222 = vmatpush1.msra.mxu0 0.0
    %223 = vmatprep.subr.mxu0 0.0
    %224 = vmatpush1.msra.mxu0 0.0
    %225 = vmatprep.subr.mxu0 0.0
    %226 = vmatpush1.msra.mxu0 0.0
    %227 = vmatprep.subr.mxu0 0.0
    %228 = vmatpush1.msra.mxu0 0.0
    %229 = vmatprep.subr.mxu0 0.0
    %230 = vmatpush1.msra.mxu0 0.0
    %231 = vmatprep.subr.mxu0 0.0
    %232 = vmatpush1.msra.mxu0 0.0
    %233 = vmatprep.subr.mxu0 0.0
    %234 = vmatpush1.msra.mxu0 0.0
    %235 = vmatprep.subr.mxu0 0.0
    %236 = vmatpush1.msra.mxu0 0.0
    %237 = vmatprep.subr.mxu0 0.0
    %238 = vmatpush1.msra.mxu0 0.0
    %239 = vmatprep.subr.mxu0 0.0
    %240 = vmatpush1.msra.mxu0 0.0
    %241 = vmatprep.subr.mxu0 0.0
    %242 = vmatpush1.msra.mxu0 0.0
    %243 = vmatprep.mubr.f32.mxu0 0.0
    %244 = vmatmul.mubr.f32.gmra.mrb[0].mxu0 %v79
    %v245 = vpop.f32.mrb[0].mxu0
    %v246 = vadd.f32 0.0, %v245
    %v247 = vpop.f32.mrb[0].mxu0
    %248 = vmatprep.mubr.f32.mxu0 0.0
    %249 = vmatmul.mubr.f32.gmra.mrb[0].mxu0 %v82
    %v250 = vpop.f32.mrb[0].mxu0
    %v251 = vadd.f32 0.0, %v250
    %v252 = vpop.f32.mrb[0].mxu0
    %253 = vmatprep.mubr.f32.mxu0 0.0
    %254 = vmatmul.mubr.f32.gmra.mrb[0].mxu0 %v85
    %v255 = vpop.f32.mrb[0].mxu0
    %v256 = vadd.f32 0.0, %v255
    %v257 = vpop.f32.mrb[0].mxu0
    %258 = vmatprep.mubr.f32.mxu0 0.0
    %259 = vmatmul.mubr.f32.gmra.mrb[0].mxu0 %v88
    %v260 = vpop.f32.mrb[0].mxu0
    %v261 = vadd.f32 0.0, %v260
    %v262 = vpop.f32.mrb[0].mxu0
    %263 = vdwg.mxu0
    %v264 = vld [vmem:[%s1] sm:$0x1]
    %v265 = vld [vmem:[%s1 + $0x1] sm:$0x1]
    %v268 = vlaneseq
    %v269 = vshrl.u32 %v268, 7
    %v270 = vsub.s32 0, %v269
    %v271 = vrot.slane %v264, %v270
    %v272 = vlaneseq
    %v273 = vshrl.u32 %v272, 7
    %v274 = vsub.s32 0, %v273
    %v275 = vrot.slane %v265, %v274
    %v278 = vadd.f32 %v157, %v271
    %v279 = vadd.f32 %v162, %v271
    %v280 = vadd.f32 %v167, %v275
    %v281 = vadd.f32 %v172, %v275
    %v282 = vld [vmem:[%s2] sm:$0x1]
    %v283 = vld [vmem:[%s2 + $0x1] sm:$0x1]
    %v286 = vlaneseq
    %v287 = vshrl.u32 %v286, 7
    %v288 = vsub.s32 0, %v287
    %v289 = vrot.slane %v282, %v288
    %v290 = vlaneseq
    %v291 = vshrl.u32 %v290, 7
    %v292 = vsub.s32 0, %v291
    %v293 = vrot.slane %v283, %v292
    %v296 = vadd.f32 %v246, %v289
    %v297 = vadd.f32 %v251, %v289
    %v298 = vadd.f32 %v256, %v293
    %v299 = vadd.f32 %v261, %v293
    %v300 = vtanh.pop %v278
    %v301 = vtanh.pop %v279
    %v302 = vtanh.pop %v280
    %v303 = vtanh.pop %v281
    %v304 = vxor.u32 %v296, 2147483648
    %v305 = vxor.u32 %v297, 2147483648
    %v306 = vxor.u32 %v298, 2147483648
    %v307 = vxor.u32 %v299, 2147483648
    %v308 = vmul.f32 %v304, 1.442695
    %v309 = vpow.pop %v308
    %v310 = vmul.f32 %v305, 1.442695
    %v311 = vpow.pop %v310
    %v312 = vmul.f32 %v306, 1.442695
    %v313 = vpow.pop %v312
    %v314 = vmul.f32 %v307, 1.442695
    %v315 = vpow.pop %v314
    %v316 = vadd.f32 %v309, 1.0
    %v317 = vadd.f32 %v311, 1.0
    %v318 = vadd.f32 %v313, 1.0
    %v319 = vadd.f32 %v315, 1.0
    %v320 = vrcp.pop %v316
    %v321 = vmul.f32 1.0, %v320
    %v322 = vrcp.pop %v317
    %v323 = vmul.f32 1.0, %v322
    %v324 = vrcp.pop %v318
    %v325 = vmul.f32 1.0, %v324
    %v326 = vrcp.pop %v319
    %v327 = vmul.f32 1.0, %v326
    %v328 = vmul.f32 %v300, %v321
    %v329 = vmul.f32 %v301, %v323
    %v330 = vmul.f32 %v302, %v325
    %v331 = vmul.f32 %v303, %v327
    %v332 = vld [vmem:[%s5] sm:$0x1]
    %v334 = vlaneseq
    %v335 = vshrl.u32 %v334, 7
    %v336 = vsub.s32 0, %v335
    %v337 = vrot.slane %v332, %v336
    %v339 = vmul.f32 %v328, %v337
    %v340 = vmul.f32 %v329, %v337
    %v341 = vmul.f32 %v330, %v337
    %v342 = vmul.f32 %v331, %v337
    %v343 = vsel %vm77, %v339, 0.0
    %344 = vadd.xlane.f32.xlu0 %v343
    %v345 = vpop.xlane.xlu0 %344
    %v346 = vsel %vm77, %v340, 0.0
    %347 = vadd.xlane.f32.xlu0 %v346
    %v348 = vpop.xlane.xlu0 %347
    %v349 = vsel %vm77, %v341, 0.0
    %350 = vadd.xlane.f32.xlu0 %v349
    %v351 = vpop.xlane.xlu0 %350
    %v352 = vsel %vm77, %v342, 0.0
    %353 = vadd.xlane.f32.xlu0 %v352
    %v354 = vpop.xlane.xlu0 %353
    %v355 = vld [vmem:[#allocation2] sm:$0x1]
    %v357 = vlaneseq
    %v358 = vshrl.u32 %v357, 7
    %v359 = vsub.s32 0, %v358
    %v360 = vrot.slane %v355, %v359
    %v362 = vadd.f32 %v345, %v360
    %v363 = vadd.f32 %v348, %v360
    %v364 = vadd.f32 %v351, %v360
    %v365 = vadd.f32 %v354, %v360
    %vm366 = vcmask 7168
    %v367 = vsel %vm366, %v362, -inf
    %v368 = vsel %vm366, %v363, -inf
    %v369 = vmax.f32 %v367, %v368
    %v370 = vrot.slane %v369, 4
    %v371 = vmax.f32 %v369, %v370
    %v372 = vrot.slane %v371, 2
    %v373 = vmax.f32 %v371, %v372
    %v374 = vrot.slane %v373, 1
    %v375 = vmax.f32 %v373, %v374
    %v376 = vsel %vm366, %v364, -inf
    %v377 = vsel %vm366, %v365, -inf
    %v378 = vmax.f32 %v376, %v377
    %v379 = vrot.slane %v378, 4
    %v380 = vmax.f32 %v378, %v379
    %v381 = vrot.slane %v380, 2
    %v382 = vmax.f32 %v380, %v381
    %v383 = vrot.slane %v382, 1
    %v384 = vmax.f32 %v382, %v383
    %v385 = vsub.f32 %v362, %v375
    %v386 = vsub.f32 %v363, %v375
    %v387 = vsub.f32 %v364, %v384
    %v388 = vsub.f32 %v365, %v384
    %v389 = vmul.f32 %v385, 1.442695
    %v390 = vpow.pop %v389
    %v391 = vmul.f32 %v386, 1.442695
    %v392 = vpow.pop %v391
    %v393 = vmul.f32 %v387, 1.442695
    %v394 = vpow.pop %v393
    %v395 = vmul.f32 %v388, 1.442695
    %v396 = vpow.pop %v395
    %v397 = vsel %vm366, %v390, 0.0
    %v398 = vsel %vm366, %v392, 0.0
    %v399 = vadd.f32 %v397, %v398
    %v400 = vrot.slane %v399, 4
    %v401 = vadd.f32 %v399, %v400
    %v402 = vrot.slane %v401, 2
    %v403 = vadd.f32 %v401, %v402
    %v404 = vrot.slane %v403, 1
    %v405 = vadd.f32 %v403, %v404
    %v406 = vsel %vm366, %v394, 0.0
    %v407 = vsel %vm366, %v396, 0.0
    %v408 = vadd.f32 %v406, %v407
    %v409 = vrot.slane %v408, 4
    %v410 = vadd.f32 %v408, %v409
    %v411 = vrot.slane %v410, 2
    %v412 = vadd.f32 %v410, %v411
    %v413 = vrot.slane %v412, 1
    %v414 = vadd.f32 %v412, %v413
    %v415 = vrcp.pop %v405
    %v416 = vrcp.pop %v414
    %v417 = vmul.f32 %v390, %v415
    %v418 = vmul.f32 %v392, %v415
    %v419 = vmul.f32 %v394, %v416
    %v420 = vmul.f32 %v396, %v416
    %421 = vst.msk [vmem:[%s7] sm:$0xff] %vm366, %v417
    %422 = vst.msk [vmem:[%s7 + $0x8] sm:$0xff] %vm366, %v418
    %423 = vst.msk [vmem:[%s7 + $0x10] sm:$0xff] %vm366, %v419
    %424 = vst.msk [vmem:[%s7 + $0x18] sm:$0xff] %vm366, %v420
    // Predicated region
    $region42: #{tpu_custom_call.1} parent=1 // pred_check
      _
    $region43: #{tpu_custom_call.1} parent=1 // pred_check_branch
      %426 = sbr.rel (0) target = $region45
    $region44: #{tpu_custom_call.1} parent=1 // pred_region
      _
    $region45: #{tpu_custom_call.1} parent=1 // pred_fallthru
      _
    // Predicated region
    $region46: #{tpu_custom_call.1} parent=1 // pred_check
      _
    $region47: #{tpu_custom_call.1} parent=1 // pred_check_branch
      %428 = sbr.rel (0) target = $region49
    $region48: #{tpu_custom_call.1} parent=1 // pred_region
      _
    $region49: #{tpu_custom_call.1} parent=1 // pred_fallthru
      _
    %429 = vsyncpa [#allocation4], 1
    %430 = vsyncpa [#allocation6], 1

</llo_original>
